<compile_context>
chip_gen: v7x
topology: tpu7x:2x2x1
jax: 0.10.0
libtpu: 0.0.40
codegen_flags: <defaults>
</compile_context>

<pallas_src>
import math

import jax
import jax.numpy as jnp
from jax.experimental import pallas as pl
from jax.experimental.pallas import tpu as pltpu

LANE = 128  # TPU lane width; hidden / fc3-output dims are zero-padded to this.


def _round_up(n, m):
    return ((n + m - 1) // m) * m


def _default_act_dtype():
    """bf16 tanh on bf16-capable VPU/EUP generations (v6e/v7x); f32 elsewhere."""
    try:
        kind = jax.devices()[0].device_kind.lower()
    except Exception:
        return jnp.float32
    return jnp.bfloat16 if ("v6" in kind or "v7" in kind) else jnp.float32


def _make_critic_kernel(act_dtype):
    def kernel(x_ref, w1_ref, b1_ref, w2_ref, b2_ref, w3_ref, b3_ref, out_ref):
        # x tile: (TM, S) bf16 (cast once in the wrapper).  Weights bf16
        # (MXU-native), biases f32, f32 accumulation on the MXU.
        x = x_ref[...]

        h1 = jnp.dot(x, w1_ref[...], preferred_element_type=jnp.float32) + b1_ref[...]
        h1 = jnp.tanh(h1.astype(act_dtype))           # bf16 on v6e/v7x, f32 on v5e

        h2 = jnp.dot(h1.astype(jnp.bfloat16), w2_ref[...],
                     preferred_element_type=jnp.float32) + b2_ref[...]
        h2 = jnp.tanh(h2.astype(act_dtype))

        v = jnp.dot(h2.astype(jnp.bfloat16), w3_ref[...],
                    preferred_element_type=jnp.float32) + b3_ref[...]  # (TM, 128) f32
        # Only column 0 is the real value head (w3/b3 columns 1..127 are zero
        # padding); store just that column -> 4 B/row HBM writeback.
        out_ref[...] = v[:, :1].astype(out_ref.dtype)                  # (TM, 1)

    return kernel


def critic_forward(x, padded_params, *, block_m=1024, act_dtype=None):
    """x: [B, state_size] float32 -> value: [B, 1] float32."""
    w1, b1, w2, b2, w3, b3 = padded_params
    B, S = x.shape
    if act_dtype is None:
        act_dtype = _default_act_dtype()

    # Batch tile: a multiple of 128, as large as block_m, but capped so the
    # grid has >= 2 steps whenever B > 128 (lets the "parallel" batch axis
    # feed both TensorCores on v7x; costs only one extra ~0.35us step on
    # single-TC v5e/v6e).
    b128 = _round_up(B, 128)
    half = _round_up(-(-b128 // 2), 128)
    tm = max(128, min(_round_up(block_m, 128), half))
    b_pad = _round_up(B, tm)
    grid = (b_pad // tm,)

    # Cast x to bf16 once (halves its HBM read / VMEM tile) and pad the batch.
    x = x.astype(jnp.bfloat16)
    if b_pad != B:
        x = jnp.pad(x, ((0, b_pad - B), (0, 0)))

    # Weights/biases: same block every grid step -> stay resident in VMEM.
    resident = lambda a: pl.BlockSpec(a.shape, lambda i: (0, 0))

    out = pl.pallas_call(
        _make_critic_kernel(act_dtype),
        out_shape=jax.ShapeDtypeStruct((b_pad, 1), jnp.float32),
        grid=grid,
        in_specs=[
            pl.BlockSpec((tm, S), lambda i: (i, 0)),   # x: pipelined over batch
            resident(w1), resident(b1),
            resident(w2), resident(b2),
            resident(w3), resident(b3),
        ],
        out_specs=pl.BlockSpec((tm, 1), lambda i: (i, 0)),
        compiler_params=pltpu.CompilerParams(
            dimension_semantics=("parallel",),          # shard batch across TCs (v7x)
            vmem_limit_bytes=32 * 1024 * 1024,
        ),
    )(x, w1, b1, w2, b2, w3, b3)

    # Padded batch rows carry garbage values (bias -> tanh path); they are
    # sliced away here.  Any future reduction over the raw kernel output
    # (e.g. a mean value) must mask rows >= B.
    return out[:B]


def init_critic_params(key, state_size, hidden_size):
    """Deterministic init mimicking PyTorch nn.Linear default U(-1/sqrt(fan_in), +)."""
    ks = jax.random.split(key, 6)

    def linear(kw, kb, fan_in, fan_out):
        bound = 1.0 / math.sqrt(fan_in)
        w = jax.random.uniform(kw, (fan_in, fan_out), jnp.float32, -bound, bound)
        b = jax.random.uniform(kb, (1, fan_out), jnp.float32, -bound, bound)
        return w, b

    w1, b1 = linear(ks[0], ks[1], state_size, hidden_size)
    w2, b2 = linear(ks[2], ks[3], hidden_size, hidden_size)
    w3, b3 = linear(ks[4], ks[5], hidden_size, 1)
    return (w1, b1, w2, b2, w3, b3)


def pad_params_for_kernel(params):
    """Zero-pad hidden dims (and fc3's output dim) to 128 lanes and cast
    weights to bf16 (done once, outside the hot path).  Padded hidden units
    are exact no-ops: zero bias -> tanh(0)=0 and zero fan-out rows; the
    kernel reads only column 0 of the fc3 result, so the padded fc3 columns
    never influence the output."""
    w1, b1, w2, b2, w3, b3 = params
    S, H = w1.shape
    Hp = _round_up(H, LANE)

    def pad2(a, rows, cols):
        return jnp.pad(a, ((0, rows - a.shape[0]), (0, cols - a.shape[1])))

    w1p = pad2(w1, S, Hp).astype(jnp.bfloat16)
    w2p = pad2(w2, Hp, Hp).astype(jnp.bfloat16)
    w3p = pad2(w3, Hp, LANE).astype(jnp.bfloat16)
    b1p = pad2(b1, 1, Hp)    # biases stay f32
    b2p = pad2(b2, 1, Hp)
    b3p = pad2(b3, 1, LANE)
    return (w1p, b1p, w2p, b2p, w3p, b3p)


def _reference(x, params):
    w1, b1, w2, b2, w3, b3 = params
    h1 = jnp.tanh(x @ w1 + b1)
    h2 = jnp.tanh(h1 @ w2 + b2)
    return h2 @ w3 + b3


if __name__ == "__main__":
    STATE_SIZE, HIDDEN = 8, 32

    key = jax.random.PRNGKey(0)
    kx, kp, kx2 = jax.random.split(key, 3)

    params = init_critic_params(kp, STATE_SIZE, HIDDEN)
    padded = pad_params_for_kernel(params)

    # bf16 weights/activations (and bf16 tanh on v6e/v7x) give ~1e-2 relative
    # error vs the f32 reference; keep fc3 in f32 in production if gradients
    # need tighter accuracy.
    ATOL = RTOL = 3e-2

    # Small batch (single grid step).
    x_small = jax.random.normal(kx, (4, STATE_SIZE), dtype=jnp.float32)
    v_small = jax.block_until_ready(critic_forward(x_small, padded))
    assert v_small.shape == (4, 1)
    assert jnp.allclose(v_small, _reference(x_small, params), atol=ATOL, rtol=RTOL), \
        "mismatch vs reference (small batch)"

    # Larger non-multiple batch: exercises batch padding + multi-step parallel grid.
    x_big = jax.random.normal(kx2, (300, STATE_SIZE), dtype=jnp.float32)
    v_big = jax.block_until_ready(critic_forward(x_big, padded))
    assert v_big.shape == (300, 1)
    assert jnp.allclose(v_big, _reference(x_big, params), atol=ATOL, rtol=RTOL), \
        "mismatch vs reference (large batch)"

    print("KERNEL_OK")
</pallas_src>

<mosaic_0001>
module attributes {stable_mosaic.version = 11 : i64} {
  func.func @kernel(%arg0: i32, %arg1: memref<128x8xbf16, #tpu.memory_space<vmem>>, %arg2: memref<8x128xbf16, #tpu.memory_space<vmem>>, %arg3: memref<1x128xf32, #tpu.memory_space<vmem>>, %arg4: memref<128x128xbf16, #tpu.memory_space<vmem>>, %arg5: memref<1x128xf32, #tpu.memory_space<vmem>>, %arg6: memref<128x128xbf16, #tpu.memory_space<vmem>>, %arg7: memref<1x128xf32, #tpu.memory_space<vmem>>, %arg8: memref<128x1xf32, #tpu.memory_space<vmem>>) attributes {dimension_semantics = [#tpu.dimension_semantics<parallel>], iteration_bounds = array<i64: 1>, scalar_prefetch = 0 : i64, scratch_operands = 0 : i64, tpu.core_type = #tpu.core_type<tc>, window_params = [{transform_indices = @transform_0, window_bounds = array<i64: 128, 8>}, {pipeline_mode = #tpu.pipeline_mode<synchronous>, transform_indices = @transform_1, window_bounds = array<i64: 8, 128>}, {pipeline_mode = #tpu.pipeline_mode<synchronous>, transform_indices = @transform_2, window_bounds = array<i64: 1, 128>}, {pipeline_mode = #tpu.pipeline_mode<synchronous>, transform_indices = @transform_3, window_bounds = array<i64: 128, 128>}, {pipeline_mode = #tpu.pipeline_mode<synchronous>, transform_indices = @transform_4, window_bounds = array<i64: 1, 128>}, {pipeline_mode = #tpu.pipeline_mode<synchronous>, transform_indices = @transform_5, window_bounds = array<i64: 128, 128>}, {pipeline_mode = #tpu.pipeline_mode<synchronous>, transform_indices = @transform_6, window_bounds = array<i64: 1, 128>}, {transform_indices = @transform_7, window_bounds = array<i64: 128, 1>}]} {
    %c0 = arith.constant 0 : index
    %c0_0 = arith.constant 0 : index
    %0 = vector.load %arg1[%c0, %c0_0] : memref<128x8xbf16, #tpu.memory_space<vmem>>, vector<128x8xbf16>
    %c0_1 = arith.constant 0 : index
    %c0_2 = arith.constant 0 : index
    %1 = vector.load %arg2[%c0_1, %c0_2] : memref<8x128xbf16, #tpu.memory_space<vmem>>, vector<8x128xbf16>
    %cst = arith.constant dense<0.000000e+00> : vector<128x128xf32>
    %2 = tpu.matmul %0, %1, %cst {dimension_numbers = #tpu.dot_dimension_numbers<[1], [0], [0], [1], [0, 0, 1, 1], [], []>} : vector<128x8xbf16>, vector<8x128xbf16>, vector<128x128xf32> -> vector<128x128xf32>
    %c0_3 = arith.constant 0 : index
    %c0_4 = arith.constant 0 : index
    %3 = vector.load %arg3[%c0_3, %c0_4] : memref<1x128xf32, #tpu.memory_space<vmem>>, vector<1x128xf32>
    %4 = vector.broadcast %3 : vector<1x128xf32> to vector<128x128xf32>
    %5 = arith.addf %2, %4 : vector<128x128xf32>
    %6 = math.tanh %5 : vector<128x128xf32>
    %7 = arith.truncf %6 : vector<128x128xf32> to vector<128x128xbf16>
    %c0_5 = arith.constant 0 : index
    %c0_6 = arith.constant 0 : index
    %8 = vector.load %arg4[%c0_5, %c0_6] : memref<128x128xbf16, #tpu.memory_space<vmem>>, vector<128x128xbf16>
    %cst_7 = arith.constant dense<0.000000e+00> : vector<128x128xf32>
    %9 = tpu.matmul %7, %8, %cst_7 {dimension_numbers = #tpu.dot_dimension_numbers<[1], [0], [0], [1], [0, 0, 1, 1], [], []>} : vector<128x128xbf16>, vector<128x128xbf16>, vector<128x128xf32> -> vector<128x128xf32>
    %c0_8 = arith.constant 0 : index
    %c0_9 = arith.constant 0 : index
    %10 = vector.load %arg5[%c0_8, %c0_9] : memref<1x128xf32, #tpu.memory_space<vmem>>, vector<1x128xf32>
    %11 = vector.broadcast %10 : vector<1x128xf32> to vector<128x128xf32>
    %12 = arith.addf %9, %11 : vector<128x128xf32>
    %13 = math.tanh %12 : vector<128x128xf32>
    %14 = arith.truncf %13 : vector<128x128xf32> to vector<128x128xbf16>
    %c0_10 = arith.constant 0 : index
    %c0_11 = arith.constant 0 : index
    %15 = vector.load %arg6[%c0_10, %c0_11] : memref<128x128xbf16, #tpu.memory_space<vmem>>, vector<128x128xbf16>
    %cst_12 = arith.constant dense<0.000000e+00> : vector<128x128xf32>
    %16 = tpu.matmul %14, %15, %cst_12 {dimension_numbers = #tpu.dot_dimension_numbers<[1], [0], [0], [1], [0, 0, 1, 1], [], []>} : vector<128x128xbf16>, vector<128x128xbf16>, vector<128x128xf32> -> vector<128x128xf32>
    %c0_13 = arith.constant 0 : index
    %c0_14 = arith.constant 0 : index
    %17 = vector.load %arg7[%c0_13, %c0_14] : memref<1x128xf32, #tpu.memory_space<vmem>>, vector<1x128xf32>
    %18 = vector.broadcast %17 : vector<1x128xf32> to vector<128x128xf32>
    %19 = arith.addf %16, %18 : vector<128x128xf32>
    %20 = vector.extract_strided_slice %19 {offsets = [0, 0], sizes = [128, 1], strides = [1, 1]} : vector<128x128xf32> to vector<128x1xf32>
    %c0_15 = arith.constant 0 : index
    %c0_16 = arith.constant 0 : index
    %21 = vector.load %arg8[%c0_15, %c0_16] : memref<128x1xf32, #tpu.memory_space<vmem>>, vector<128x1xf32>
    tpu.vector_store %arg8[%c0_15, %c0_16], %20 {strides = array<i32>} : memref<128x1xf32, #tpu.memory_space<vmem>>, vector<128x1xf32>,
    return
  }
  func.func @transform_0(%arg0: i32) -> (i32, i32) {
    %c0_i32 = arith.constant 0 : i32
    %c0_i32_0 = arith.constant 0 : i32
    return %arg0, %c0_i32 : i32, i32
  }
  func.func @transform_1(%arg0: i32) -> (i32, i32) {
    %c0_i32 = arith.constant 0 : i32
    %c0_i32_0 = arith.constant 0 : i32
    %c0_i32_1 = arith.constant 0 : i32
    return %c0_i32, %c0_i32_0 : i32, i32
  }
  func.func @transform_2(%arg0: i32) -> (i32, i32) {
    %c0_i32 = arith.constant 0 : i32
    %c0_i32_0 = arith.constant 0 : i32
    %c0_i32_1 = arith.constant 0 : i32
    return %c0_i32, %c0_i32_0 : i32, i32
  }
  func.func @transform_3(%arg0: i32) -> (i32, i32) {
    %c0_i32 = arith.constant 0 : i32
    %c0_i32_0 = arith.constant 0 : i32
    %c0_i32_1 = arith.constant 0 : i32
    return %c0_i32, %c0_i32_0 : i32, i32
  }
  func.func @transform_4(%arg0: i32) -> (i32, i32) {
    %c0_i32 = arith.constant 0 : i32
    %c0_i32_0 = arith.constant 0 : i32
    %c0_i32_1 = arith.constant 0 : i32
    return %c0_i32, %c0_i32_0 : i32, i32
  }
  func.func @transform_5(%arg0: i32) -> (i32, i32) {
    %c0_i32 = arith.constant 0 : i32
    %c0_i32_0 = arith.constant 0 : i32
    %c0_i32_1 = arith.constant 0 : i32
    return %c0_i32, %c0_i32_0 : i32, i32
  }
  func.func @transform_6(%arg0: i32) -> (i32, i32) {
    %c0_i32 = arith.constant 0 : i32
    %c0_i32_0 = arith.constant 0 : i32
    %c0_i32_1 = arith.constant 0 : i32
    return %c0_i32, %c0_i32_0 : i32, i32
  }
  func.func @transform_7(%arg0: i32) -> (i32, i32) {
    %c0_i32 = arith.constant 0 : i32
    %c0_i32_0 = arith.constant 0 : i32
    return %arg0, %c0_i32 : i32, i32
  }
}

</mosaic_0001>

<llo_original>
// kernel: tpu_custom_call.1
$region0: #{tpu_custom_call.1}
  #allocation0 [shape = 'u32[]', space=smem, size = 0x4, offset = 0x4, fixed_abs, tag = 'smem constant byte address 0x4 - core index']
  #allocation1 [shape = 'u32[144,128]{1,0:T(1,128)}', space=vmem, size = 0x12000, scoped, tag = 'internal scratch']
  %s0 = inlined_call_operand.vmem [shape: bf16[128,8], index: 0, kind: input, shape index: {}]
  %s1 = inlined_call_operand.vmem [shape: bf16[8,128], index: 1, kind: input, shape index: {}]
  %s2 = inlined_call_operand.vmem [shape: f32[1,128], index: 2, kind: input, shape index: {}]
  %s3 = inlined_call_operand.vmem [shape: bf16[128,128], index: 3, kind: input, shape index: {}]
  %s4 = inlined_call_operand.vmem [shape: f32[1,128], index: 4, kind: input, shape index: {}]
  %s5 = inlined_call_operand.hbm [shape: bf16[128,128], index: 5, kind: input, shape index: {}]
  %s6 = inlined_call_operand.vmem [shape: f32[1,128], index: 6, kind: input, shape index: {}]
  %s7 = inlined_call_operand.vmem [shape: f32[128,1], index: 7, kind: output, shape index: {}]
  %s8 = sld [smem:[#allocation0]]
  $region42: #{tpu_custom_call.1} parent=0
    _
  %s10 = ssub.s32 1, %s8
  %s11 = scalar_select 0, %s10, %s8
  $region1: #{tpu_custom_call.1} parent=0
    #allocation2 [shape = 'u8[32768]{0}', space=vmem, size = 0x8000, scoped, tag = 'input window, operand 5, single buffered']
    #allocation3 [shape = 's32[1]{0}', space=sflag, size = 0x4, scoped, tag = 'scoped memory for tpu_custom_call.1']
    %12 = vsyncpa [#allocation3], 0
    // Predicated region
    $region2: #{tpu_custom_call.1} parent=1 // pred_check
      _
    $region3: #{tpu_custom_call.1} parent=1 // pred_check_branch
      %14 = sbr.rel (0) target = $region5
    $region4: #{tpu_custom_call.1} parent=1 // pred_region
      _
    $region5: #{tpu_custom_call.1} parent=1 // pred_fallthru
      _
    // Predicated region
    $region6: #{tpu_custom_call.1} parent=1 // pred_check
      _
    $region7: #{tpu_custom_call.1} parent=1 // pred_check_branch
      %16 = sbr.rel (0) target = $region9
    $region8: #{tpu_custom_call.1} parent=1 // pred_region
      _
    $region9: #{tpu_custom_call.1} parent=1 // pred_fallthru
      _
    // Predicated region
    $region10: #{tpu_custom_call.1} parent=1 // pred_check
      _
    $region11: #{tpu_custom_call.1} parent=1 // pred_check_branch
      %18 = sbr.rel (0) target = $region13
    $region12: #{tpu_custom_call.1} parent=1 // pred_region
      _
    $region13: #{tpu_custom_call.1} parent=1 // pred_fallthru
      _
    // Predicated region
    $region14: #{tpu_custom_call.1} parent=1 // pred_check
      _
    $region15: #{tpu_custom_call.1} parent=1 // pred_check_branch
      %20 = sbr.rel (0) target = $region17
    $region16: #{tpu_custom_call.1} parent=1 // pred_region
      _
    $region17: #{tpu_custom_call.1} parent=1 // pred_fallthru
      _
    // Predicated region
    $region18: #{tpu_custom_call.1} parent=1 // pred_check
      _
    $region19: #{tpu_custom_call.1} parent=1 // pred_check_branch
      %22 = sbr.rel (0) target = $region21
    $region20: #{tpu_custom_call.1} parent=1 // pred_region
      _
    $region21: #{tpu_custom_call.1} parent=1 // pred_fallthru
      _
    // Predicated region
    $region22: #{tpu_custom_call.1} parent=1 // pred_check
      _
    $region23: #{tpu_custom_call.1} parent=1 // pred_check_branch
      %24 = sbr.rel (0) target = $region25
    $region24: #{tpu_custom_call.1} parent=1 // pred_region
      %s26 = ssub.s32 1024, 1024
      %27 = vsyncadd [#allocation3], %s26
      %s28 = sshll.u32 [#allocation2], 4
      %s29 = int_to_ptr.vmem [resolvable:$true] %s28
      %34 = dma.hbm_to_vmem [thread:$0]  %s5, 1024, %s29, [#allocation3], 64, 64, 4
    $region25: #{tpu_custom_call.1} parent=1 // pred_fallthru
      _
    // Predicated region
    $region26: #{tpu_custom_call.1} parent=1 // pred_check
      _
    $region27: #{tpu_custom_call.1} parent=1 // pred_check_branch
      %36 = sbr.rel (0) target = $region29
    $region28: #{tpu_custom_call.1} parent=1 // pred_region
      _
    $region29: #{tpu_custom_call.1} parent=1 // pred_fallthru
      _
    // Predicated region
    $region30: #{tpu_custom_call.1} parent=1 // pred_check
      _
    $region31: #{tpu_custom_call.1} parent=1 // pred_check_branch
      %38 = sbr.rel (0) target = $region33
    $region32: #{tpu_custom_call.1} parent=1 // pred_region
      %39 = dma.done [#allocation3], 1024
    $region33: #{tpu_custom_call.1} parent=1 // pred_fallthru
      _
    %v41 = vld [vmem:[%s0] sm:$0xf]
    %v42 = vld [vmem:[%s0 + $0x4] sm:$0xf]
    %v43 = vld [vmem:[%s0 + $0x8] sm:$0xf]
    %v44 = vld [vmem:[%s0 + $0xc] sm:$0xf]
    %v45 = vld [vmem:[%s0 + $0x10] sm:$0xf]
    %v46 = vld [vmem:[%s0 + $0x14] sm:$0xf]
    %v47 = vld [vmem:[%s0 + $0x18] sm:$0xf]
    %v48 = vld [vmem:[%s0 + $0x1c] sm:$0xf]
    %v49 = vld [vmem:[%s0 + $0x20] sm:$0xf]
    %v50 = vld [vmem:[%s0 + $0x24] sm:$0xf]
    %v51 = vld [vmem:[%s0 + $0x28] sm:$0xf]
    %v52 = vld [vmem:[%s0 + $0x2c] sm:$0xf]
    %v53 = vld [vmem:[%s0 + $0x30] sm:$0xf]
    %v54 = vld [vmem:[%s0 + $0x34] sm:$0xf]
    %v55 = vld [vmem:[%s0 + $0x38] sm:$0xf]
    %v56 = vld [vmem:[%s0 + $0x3c] sm:$0xf]
    %v57 = vld [vmem:[%s1] sm:$0xf]
    %v58 = vld [vmem:[%s2] sm:$0x1]
    %v60 = vlaneseq
    %v61 = vshrl.u32 %v60, 7
    %v62 = vsub.s32 0, %v61
    %v63 = vrot.slane %v58, %v62
    %v81 = vunpack.c.l.b16 %v41
    %v82 = vunpack.c.l.b16 %v42
    %v83 = vunpack.c.l.b16 %v43
    %v84 = vunpack.c.l.b16 %v44
    %v85 = vunpack.c.l.b16 %v45
    %v86 = vunpack.c.l.b16 %v46
    %v87 = vunpack.c.l.b16 %v47
    %v88 = vunpack.c.l.b16 %v48
    %v89 = vunpack.c.l.b16 %v49
    %v90 = vunpack.c.l.b16 %v50
    %v91 = vunpack.c.l.b16 %v51
    %v92 = vunpack.c.l.b16 %v52
    %v93 = vunpack.c.l.b16 %v53
    %v94 = vunpack.c.l.b16 %v54
    %v95 = vunpack.c.l.b16 %v55
    %v96 = vunpack.c.l.b16 %v56
    %v97 = vpack.c.b16 %v82, %v81
    %v98 = vpack.c.b16 %v84, %v83
    %v99 = vpack.c.b16 %v86, %v85
    %v100 = vpack.c.b16 %v88, %v87
    %v101 = vpack.c.b16 %v90, %v89
    %v102 = vpack.c.b16 %v92, %v91
    %v103 = vpack.c.b16 %v94, %v93
    %v104 = vpack.c.b16 %v96, %v95
    %vm105 = vcmask 64512
    %v107 = vsel %vm105, %v97, 0
    %v110 = vsel %vm105, %v98, 0
    %v113 = vsel %vm105, %v99, 0
    %v116 = vsel %vm105, %v100, 0
    %v119 = vsel %vm105, %v101, 0
    %v122 = vsel %vm105, %v102, 0
    %v125 = vsel %vm105, %v103, 0
    %v128 = vsel %vm105, %v104, 0
    %vm130 = vcmask 1043456
    %v132 = vsel %vm130, %v57, 0
    %134 = vmatprep.subr.bf16.mxu0 0
    %135 = vmatpush1.bf16.msra.mxu0 %v132
    %136 = vmatprep.subr.bf16.mxu0 0
    %137 = vmatpush1.bf16.msra.mxu0 0
    %138 = vmatprep.subr.bf16.mxu0 0
    %139 = vmatpush1.bf16.msra.mxu0 0
    %140 = vmatprep.subr.bf16.mxu0 0
    %141 = vmatpush1.bf16.msra.mxu0 0
    %142 = vmatprep.subr.bf16.mxu0 0
    %143 = vmatpush1.bf16.msra.mxu0 0
    %144 = vmatprep.subr.bf16.mxu0 0
    %145 = vmatpush1.bf16.msra.mxu0 0
    %146 = vmatprep.subr.bf16.mxu0 0
    %147 = vmatpush1.bf16.msra.mxu0 0
    %148 = vmatprep.subr.bf16.mxu0 0
    %149 = vmatpush1.bf16.msra.mxu0 0
    %150 = vmatprep.subr.bf16.mxu0 0
    %151 = vmatpush1.bf16.msra.mxu0 0
    %152 = vmatprep.subr.bf16.mxu0 0
    %153 = vmatpush1.bf16.msra.mxu0 0
    %154 = vmatprep.subr.bf16.mxu0 0
    %155 = vmatpush1.bf16.msra.mxu0 0
    %156 = vmatprep.subr.bf16.mxu0 0
    %157 = vmatpush1.bf16.msra.mxu0 0
    %158 = vmatprep.subr.bf16.mxu0 0
    %159 = vmatpush1.bf16.msra.mxu0 0
    %160 = vmatprep.subr.bf16.mxu0 0
    %161 = vmatpush1.bf16.msra.mxu0 0
    %162 = vmatprep.subr.bf16.mxu0 0
    %163 = vmatpush1.bf16.msra.mxu0 0
    %164 = vmatprep.subr.bf16.mxu0 0
    %165 = vmatpush1.bf16.msra.mxu0 0
    %166 = vmatprep.mubr.bf16.mxu0 0
    %167 = vmatmul.mubr.bf16.gmra.mrb[0].mxu0 %v107
    %v168 = vpop.f32.mrb[0].mxu0
    %v169 = vadd.f32 %v63, %v168
    %v170 = vpop.f32.mrb[0].mxu0
    %v171 = vpop.f32.mrb[0].mxu0
    %v172 = vadd.f32 %v63, %v171
    %v173 = vpop.f32.mrb[0].mxu0
    %174 = vmatprep.mubr.bf16.mxu0 0
    %175 = vmatmul.mubr.bf16.gmra.mrb[0].mxu0 %v110
    %v176 = vpop.f32.mrb[0].mxu0
    %v177 = vadd.f32 %v63, %v176
    %v178 = vpop.f32.mrb[0].mxu0
    %v179 = vpop.f32.mrb[0].mxu0
    %v180 = vadd.f32 %v63, %v179
    %v181 = vpop.f32.mrb[0].mxu0
    %182 = vmatprep.mubr.bf16.mxu0 0
    %183 = vmatmul.mubr.bf16.gmra.mrb[0].mxu0 %v113
    %v184 = vpop.f32.mrb[0].mxu0
    %v185 = vadd.f32 %v63, %v184
    %v186 = vpop.f32.mrb[0].mxu0
    %v187 = vpop.f32.mrb[0].mxu0
    %v188 = vadd.f32 %v63, %v187
    %v189 = vpop.f32.mrb[0].mxu0
    %190 = vmatprep.mubr.bf16.mxu0 0
    %191 = vmatmul.mubr.bf16.gmra.mrb[0].mxu0 %v116
    %v192 = vpop.f32.mrb[0].mxu0
    %v193 = vadd.f32 %v63, %v192
    %v194 = vpop.f32.mrb[0].mxu0
    %v195 = vpop.f32.mrb[0].mxu0
    %v196 = vadd.f32 %v63, %v195
    %v197 = vpop.f32.mrb[0].mxu0
    %198 = vmatprep.mubr.bf16.mxu0 0
    %199 = vmatmul.mubr.bf16.gmra.mrb[0].mxu0 %v119
    %v200 = vpop.f32.mrb[0].mxu0
    %v201 = vadd.f32 %v63, %v200
    %v202 = vpop.f32.mrb[0].mxu0
    %v203 = vpop.f32.mrb[0].mxu0
    %v204 = vadd.f32 %v63, %v203
    %v205 = vpop.f32.mrb[0].mxu0
    %206 = vmatprep.mubr.bf16.mxu0 0
    %207 = vmatmul.mubr.bf16.gmra.mrb[0].mxu0 %v122
    %v208 = vpop.f32.mrb[0].mxu0
    %v209 = vadd.f32 %v63, %v208
    %v210 = vpop.f32.mrb[0].mxu0
    %v211 = vpop.f32.mrb[0].mxu0
    %v212 = vadd.f32 %v63, %v211
    %v213 = vpop.f32.mrb[0].mxu0
    %214 = vmatprep.mubr.bf16.mxu0 0
    %215 = vmatmul.mubr.bf16.gmra.mrb[0].mxu0 %v125
    %v216 = vpop.f32.mrb[0].mxu0
    %v217 = vadd.f32 %v63, %v216
    %v218 = vpop.f32.mrb[0].mxu0
    %v219 = vpop.f32.mrb[0].mxu0
    %v220 = vadd.f32 %v63, %v219
    %v221 = vpop.f32.mrb[0].mxu0
    %222 = vmatprep.mubr.bf16.mxu0 0
    %223 = vmatmul.mubr.bf16.gmra.mrb[0].mxu0 %v128
    %v224 = vpop.f32.mrb[0].mxu0
    %v225 = vadd.f32 %v63, %v224
    %v226 = vpop.f32.mrb[0].mxu0
    %v227 = vpop.f32.mrb[0].mxu0
    %v228 = vadd.f32 %v63, %v227
    %v229 = vpop.f32.mrb[0].mxu0
    %230 = vdwg.mxu0
    %v231 = vtanh.pop %v169
    %v232 = vtanh.pop %v172
    %v233 = vtanh.pop %v177
    %v234 = vtanh.pop %v180
    %v235 = vtanh.pop %v185
    %v236 = vtanh.pop %v188
    %v237 = vtanh.pop %v193
    %v238 = vtanh.pop %v196
    %v239 = vtanh.pop %v201
    %v240 = vtanh.pop %v204
    %v241 = vtanh.pop %v209
    %v242 = vtanh.pop %v212
    %v243 = vtanh.pop %v217
    %v244 = vtanh.pop %v220
    %v245 = vtanh.pop %v225
    %v246 = vtanh.pop %v228
    %v247 = vpack.c.bf16 %v232, %v231
    %v248 = vpack.c.bf16 %v234, %v233
    %v249 = vpack.c.bf16 %v236, %v235
    %v250 = vpack.c.bf16 %v238, %v237
    %v251 = vpack.c.bf16 %v240, %v239
    %v252 = vpack.c.bf16 %v242, %v241
    %v253 = vpack.c.bf16 %v244, %v243
    %v254 = vpack.c.bf16 %v246, %v245
    %v255 = vld [vmem:[%s3] sm:$0xf]
    %v256 = vld [vmem:[%s3 + $0x4] sm:$0xf]
    %v257 = vld [vmem:[%s3 + $0x8] sm:$0xf]
    %v258 = vld [vmem:[%s3 + $0xc] sm:$0xf]
    %v259 = vld [vmem:[%s3 + $0x10] sm:$0xf]
    %v260 = vld [vmem:[%s3 + $0x14] sm:$0xf]
    %v261 = vld [vmem:[%s3 + $0x18] sm:$0xf]
    %v262 = vld [vmem:[%s3 + $0x1c] sm:$0xf]
    %v263 = vld [vmem:[%s3 + $0x20] sm:$0xf]
    %v264 = vld [vmem:[%s3 + $0x24] sm:$0xf]
    %v265 = vld [vmem:[%s3 + $0x28] sm:$0xf]
    %v266 = vld [vmem:[%s3 + $0x2c] sm:$0xf]
    %v267 = vld [vmem:[%s3 + $0x30] sm:$0xf]
    %v268 = vld [vmem:[%s3 + $0x34] sm:$0xf]
    %v269 = vld [vmem:[%s3 + $0x38] sm:$0xf]
    %v270 = vld [vmem:[%s3 + $0x3c] sm:$0xf]
    %v271 = vld [vmem:[%s4] sm:$0x1]
    %v273 = vlaneseq
    %v274 = vshrl.u32 %v273, 7
    %v275 = vsub.s32 0, %v274
    %v276 = vrot.slane %v271, %v275
    %v294 = vunpack.c.l.b16 %v255
    %v295 = vunpack.c.l.b16 %v256
    %v296 = vunpack.c.l.b16 %v257
    %v297 = vunpack.c.l.b16 %v258
    %v298 = vunpack.c.l.b16 %v259
    %v299 = vunpack.c.l.b16 %v260
    %v300 = vunpack.c.l.b16 %v261
    %v301 = vunpack.c.l.b16 %v262
    %v302 = vunpack.c.l.b16 %v263
    %v303 = vunpack.c.l.b16 %v264
    %v304 = vunpack.c.l.b16 %v265
    %v305 = vunpack.c.l.b16 %v266
    %v306 = vunpack.c.l.b16 %v267
    %v307 = vunpack.c.l.b16 %v268
    %v308 = vunpack.c.l.b16 %v269
    %v309 = vunpack.c.l.b16 %v270
    %v310 = vpack.c.b16 %v295, %v294
    %v311 = vpack.c.b16 %v297, %v296
    %v312 = vpack.c.b16 %v299, %v298
    %v313 = vpack.c.b16 %v301, %v300
    %v314 = vpack.c.b16 %v303, %v302
    %v315 = vpack.c.b16 %v305, %v304
    %v316 = vpack.c.b16 %v307, %v306
    %v317 = vpack.c.b16 %v309, %v308
    %326 = vmatprep.subr.bf16.mxu0 0
    %327 = vmatpush1.bf16.msra.mxu0 %v310
    %328 = vmatprep.subr.bf16.mxu0 0
    %329 = vmatpush1.bf16.msra.mxu0 %v311
    %330 = vmatprep.subr.bf16.mxu0 0
    %331 = vmatpush1.bf16.msra.mxu0 %v312
    %332 = vmatprep.subr.bf16.mxu0 0
    %333 = vmatpush1.bf16.msra.mxu0 %v313
    %334 = vmatprep.subr.bf16.mxu0 0
    %335 = vmatpush1.bf16.msra.mxu0 %v314
    %336 = vmatprep.subr.bf16.mxu0 0
    %337 = vmatpush1.bf16.msra.mxu0 %v315
    %338 = vmatprep.subr.bf16.mxu0 0
    %339 = vmatpush1.bf16.msra.mxu0 %v316
    %340 = vmatprep.subr.bf16.mxu0 0
    %341 = vmatpush1.bf16.msra.mxu0 %v317
    %342 = vmatprep.subr.bf16.mxu0 0
    %343 = vmatpush1.bf16.msra.mxu0 0
    %344 = vmatprep.subr.bf16.mxu0 0
    %345 = vmatpush1.bf16.msra.mxu0 0
    %346 = vmatprep.subr.bf16.mxu0 0
    %347 = vmatpush1.bf16.msra.mxu0 0
    %348 = vmatprep.subr.bf16.mxu0 0
    %349 = vmatpush1.bf16.msra.mxu0 0
    %350 = vmatprep.subr.bf16.mxu0 0
    %351 = vmatpush1.bf16.msra.mxu0 0
    %352 = vmatprep.subr.bf16.mxu0 0
    %353 = vmatpush1.bf16.msra.mxu0 0
    %354 = vmatprep.subr.bf16.mxu0 0
    %355 = vmatpush1.bf16.msra.mxu0 0
    %356 = vmatprep.subr.bf16.mxu0 0
    %357 = vmatpush1.bf16.msra.mxu0 0
    %358 = vmatprep.mubr.bf16.mxu0 0
    %359 = vmatmul.mubr.bf16.gmra.mrb[0].mxu0 %v247
    %v360 = vpop.f32.mrb[0].mxu0
    %v361 = vadd.f32 %v276, %v360
    %v362 = vpop.f32.mrb[0].mxu0
    %v363 = vpop.f32.mrb[0].mxu0
    %v364 = vadd.f32 %v276, %v363
    %v365 = vpop.f32.mrb[0].mxu0
    %366 = vmatprep.mubr.bf16.mxu0 0
    %367 = vmatmul.mubr.bf16.gmra.mrb[0].mxu0 %v248
    %v368 = vpop.f32.mrb[0].mxu0
    %v369 = vadd.f32 %v276, %v368
    %v370 = vpop.f32.mrb[0].mxu0
    %v371 = vpop.f32.mrb[0].mxu0
    %v372 = vadd.f32 %v276, %v371
    %v373 = vpop.f32.mrb[0].mxu0
    %374 = vmatprep.mubr.bf16.mxu0 0
    %375 = vmatmul.mubr.bf16.gmra.mrb[0].mxu0 %v249
    %v376 = vpop.f32.mrb[0].mxu0
    %v377 = vadd.f32 %v276, %v376
    %v378 = vpop.f32.mrb[0].mxu0
    %v379 = vpop.f32.mrb[0].mxu0
    %v380 = vadd.f32 %v276, %v379
    %v381 = vpop.f32.mrb[0].mxu0
    %382 = vmatprep.mubr.bf16.mxu0 0
    %383 = vmatmul.mubr.bf16.gmra.mrb[0].mxu0 %v250
    %v384 = vpop.f32.mrb[0].mxu0
    %v385 = vadd.f32 %v276, %v384
    %v386 = vpop.f32.mrb[0].mxu0
    %v387 = vpop.f32.mrb[0].mxu0
    %v388 = vadd.f32 %v276, %v387
    %v389 = vpop.f32.mrb[0].mxu0
    %390 = vmatprep.mubr.bf16.mxu0 0
    %391 = vmatmul.mubr.bf16.gmra.mrb[0].mxu0 %v251
    %v392 = vpop.f32.mrb[0].mxu0
    %v393 = vadd.f32 %v276, %v392
    %v394 = vpop.f32.mrb[0].mxu0
    %v395 = vpop.f32.mrb[0].mxu0
    %v396 = vadd.f32 %v276, %v395
    %v397 = vpop.f32.mrb[0].mxu0
    %398 = vmatprep.mubr.bf16.mxu0 0
    %399 = vmatmul.mubr.bf16.gmra.mrb[0].mxu0 %v252
    %v400 = vpop.f32.mrb[0].mxu0
    %v401 = vadd.f32 %v276, %v400
    %v402 = vpop.f32.mrb[0].mxu0
    %v403 = vpop.f32.mrb[0].mxu0
    %v404 = vadd.f32 %v276, %v403
    %v405 = vpop.f32.mrb[0].mxu0
    %406 = vmatprep.mubr.bf16.mxu0 0
    %407 = vmatmul.mubr.bf16.gmra.mrb[0].mxu0 %v253
    %v408 = vpop.f32.mrb[0].mxu0
    %v409 = vadd.f32 %v276, %v408
    %v410 = vpop.f32.mrb[0].mxu0
    %v411 = vpop.f32.mrb[0].mxu0
    %v412 = vadd.f32 %v276, %v411
    %v413 = vpop.f32.mrb[0].mxu0
    %414 = vmatprep.mubr.bf16.mxu0 0
    %415 = vmatmul.mubr.bf16.gmra.mrb[0].mxu0 %v254
    %v416 = vpop.f32.mrb[0].mxu0
    %v417 = vadd.f32 %v276, %v416
    %v418 = vpop.f32.mrb[0].mxu0
    %v419 = vpop.f32.mrb[0].mxu0
    %v420 = vadd.f32 %v276, %v419
    %v421 = vpop.f32.mrb[0].mxu0
    %422 = vdwg.mxu0
    %v423 = vtanh.pop %v361
    %v424 = vtanh.pop %v364
    %v425 = vtanh.pop %v369
    %v426 = vtanh.pop %v372
    %v427 = vtanh.pop %v377
    %v428 = vtanh.pop %v380
    %v429 = vtanh.pop %v385
    %v430 = vtanh.pop %v388
    %v431 = vtanh.pop %v393
    %v432 = vtanh.pop %v396
    %v433 = vtanh.pop %v401
    %v434 = vtanh.pop %v404
    %v435 = vtanh.pop %v409
    %v436 = vtanh.pop %v412
    %v437 = vtanh.pop %v417
    %v438 = vtanh.pop %v420
    %v439 = vpack.c.bf16 %v424, %v423
    %v440 = vpack.c.bf16 %v426, %v425
    %v441 = vpack.c.bf16 %v428, %v427
    %v442 = vpack.c.bf16 %v430, %v429
    %v443 = vpack.c.bf16 %v432, %v431
    %v444 = vpack.c.bf16 %v434, %v433
    %v445 = vpack.c.bf16 %v436, %v435
    %v446 = vpack.c.bf16 %v438, %v437
    %v447 = vld [vmem:[#allocation2] sm:$0xf]
    %v448 = vld [vmem:[#allocation2 + $0x4] sm:$0xf]
    %v449 = vld [vmem:[#allocation2 + $0x8] sm:$0xf]
    %v450 = vld [vmem:[#allocation2 + $0xc] sm:$0xf]
    %v451 = vld [vmem:[#allocation2 + $0x10] sm:$0xf]
    %v452 = vld [vmem:[#allocation2 + $0x14] sm:$0xf]
    %v453 = vld [vmem:[#allocation2 + $0x18] sm:$0xf]
    %v454 = vld [vmem:[#allocation2 + $0x1c] sm:$0xf]
    %v455 = vld [vmem:[#allocation2 + $0x20] sm:$0xf]
    %v456 = vld [vmem:[#allocation2 + $0x24] sm:$0xf]
    %v457 = vld [vmem:[#allocation2 + $0x28] sm:$0xf]
    %v458 = vld [vmem:[#allocation2 + $0x2c] sm:$0xf]
    %v459 = vld [vmem:[#allocation2 + $0x30] sm:$0xf]
    %v460 = vld [vmem:[#allocation2 + $0x34] sm:$0xf]
    %v461 = vld [vmem:[#allocation2 + $0x38] sm:$0xf]
    %v462 = vld [vmem:[#allocation2 + $0x3c] sm:$0xf]
    %v463 = vld [vmem:[%s6] sm:$0x1]
    %v465 = vlaneseq
    %v466 = vshrl.u32 %v465, 7
    %v467 = vsub.s32 0, %v466
    %v468 = vrot.slane %v463, %v467
    %v486 = vunpack.c.l.b16 %v447
    %v487 = vunpack.c.l.b16 %v448
    %v488 = vunpack.c.l.b16 %v449
    %v489 = vunpack.c.l.b16 %v450
    %v490 = vunpack.c.l.b16 %v451
    %v491 = vunpack.c.l.b16 %v452
    %v492 = vunpack.c.l.b16 %v453
    %v493 = vunpack.c.l.b16 %v454
    %v494 = vunpack.c.l.b16 %v455
    %v495 = vunpack.c.l.b16 %v456
    %v496 = vunpack.c.l.b16 %v457
    %v497 = vunpack.c.l.b16 %v458
    %v498 = vunpack.c.l.b16 %v459
    %v499 = vunpack.c.l.b16 %v460
    %v500 = vunpack.c.l.b16 %v461
    %v501 = vunpack.c.l.b16 %v462
    %v502 = vpack.c.b16 %v487, %v486
    %v503 = vpack.c.b16 %v489, %v488
    %v504 = vpack.c.b16 %v491, %v490
    %v505 = vpack.c.b16 %v493, %v492
    %v506 = vpack.c.b16 %v495, %v494
    %v507 = vpack.c.b16 %v497, %v496
    %v508 = vpack.c.b16 %v499, %v498
    %v509 = vpack.c.b16 %v501, %v500
    %518 = vmatprep.subr.bf16.mxu0 0
    %519 = vmatpush1.bf16.msra.mxu0 %v502
    %520 = vmatprep.subr.bf16.mxu0 0
    %521 = vmatpush1.bf16.msra.mxu0 %v503
    %522 = vmatprep.subr.bf16.mxu0 0
    %523 = vmatpush1.bf16.msra.mxu0 %v504
    %524 = vmatprep.subr.bf16.mxu0 0
    %525 = vmatpush1.bf16.msra.mxu0 %v505
    %526 = vmatprep.subr.bf16.mxu0 0
    %527 = vmatpush1.bf16.msra.mxu0 %v506
    %528 = vmatprep.subr.bf16.mxu0 0
    %529 = vmatpush1.bf16.msra.mxu0 %v507
    %530 = vmatprep.subr.bf16.mxu0 0
    %531 = vmatpush1.bf16.msra.mxu0 %v508
    %532 = vmatprep.subr.bf16.mxu0 0
    %533 = vmatpush1.bf16.msra.mxu0 %v509
    %534 = vmatprep.subr.bf16.mxu0 0
    %535 = vmatpush1.bf16.msra.mxu0 0
    %536 = vmatprep.subr.bf16.mxu0 0
    %537 = vmatpush1.bf16.msra.mxu0 0
    %538 = vmatprep.subr.bf16.mxu0 0
    %539 = vmatpush1.bf16.msra.mxu0 0
    %540 = vmatprep.subr.bf16.mxu0 0
    %541 = vmatpush1.bf16.msra.mxu0 0
    %542 = vmatprep.subr.bf16.mxu0 0
    %543 = vmatpush1.bf16.msra.mxu0 0
    %544 = vmatprep.subr.bf16.mxu0 0
    %545 = vmatpush1.bf16.msra.mxu0 0
    %546 = vmatprep.subr.bf16.mxu0 0
    %547 = vmatpush1.bf16.msra.mxu0 0
    %548 = vmatprep.subr.bf16.mxu0 0
    %549 = vmatpush1.bf16.msra.mxu0 0
    %550 = vmatprep.mubr.bf16.mxu0 0
    %551 = vmatmul.mubr.bf16.gmra.mrb[0].mxu0 %v439
    %v552 = vpop.f32.mrb[0].mxu0
    %v553 = vadd.f32 %v468, %v552
    %v554 = vpop.f32.mrb[0].mxu0
    %v555 = vpop.f32.mrb[0].mxu0
    %v556 = vadd.f32 %v468, %v555
    %v557 = vpop.f32.mrb[0].mxu0
    %558 = vmatprep.mubr.bf16.mxu0 0
    %559 = vmatmul.mubr.bf16.gmra.mrb[0].mxu0 %v440
    %v560 = vpop.f32.mrb[0].mxu0
    %v561 = vadd.f32 %v468, %v560
    %v562 = vpop.f32.mrb[0].mxu0
    %v563 = vpop.f32.mrb[0].mxu0
    %v564 = vadd.f32 %v468, %v563
    %v565 = vpop.f32.mrb[0].mxu0
    %566 = vmatprep.mubr.bf16.mxu0 0
    %567 = vmatmul.mubr.bf16.gmra.mrb[0].mxu0 %v441
    %v568 = vpop.f32.mrb[0].mxu0
    %v569 = vadd.f32 %v468, %v568
    %v570 = vpop.f32.mrb[0].mxu0
    %v571 = vpop.f32.mrb[0].mxu0
    %v572 = vadd.f32 %v468, %v571
    %v573 = vpop.f32.mrb[0].mxu0
    %574 = vmatprep.mubr.bf16.mxu0 0
    %575 = vmatmul.mubr.bf16.gmra.mrb[0].mxu0 %v442
    %v576 = vpop.f32.mrb[0].mxu0
    %v577 = vadd.f32 %v468, %v576
    %v578 = vpop.f32.mrb[0].mxu0
    %v579 = vpop.f32.mrb[0].mxu0
    %v580 = vadd.f32 %v468, %v579
    %v581 = vpop.f32.mrb[0].mxu0
    %582 = vmatprep.mubr.bf16.mxu0 0
    %583 = vmatmul.mubr.bf16.gmra.mrb[0].mxu0 %v443
    %v584 = vpop.f32.mrb[0].mxu0
    %v585 = vadd.f32 %v468, %v584
    %v586 = vpop.f32.mrb[0].mxu0
    %v587 = vpop.f32.mrb[0].mxu0
    %v588 = vadd.f32 %v468, %v587
    %v589 = vpop.f32.mrb[0].mxu0
    %590 = vmatprep.mubr.bf16.mxu0 0
    %591 = vmatmul.mubr.bf16.gmra.mrb[0].mxu0 %v444
    %v592 = vpop.f32.mrb[0].mxu0
    %v593 = vadd.f32 %v468, %v592
    %v594 = vpop.f32.mrb[0].mxu0
    %v595 = vpop.f32.mrb[0].mxu0
    %v596 = vadd.f32 %v468, %v595
    %v597 = vpop.f32.mrb[0].mxu0
    %598 = vmatprep.mubr.bf16.mxu0 0
    %599 = vmatmul.mubr.bf16.gmra.mrb[0].mxu0 %v445
    %v600 = vpop.f32.mrb[0].mxu0
    %v601 = vadd.f32 %v468, %v600
    %v602 = vpop.f32.mrb[0].mxu0
    %v603 = vpop.f32.mrb[0].mxu0
    %v604 = vadd.f32 %v468, %v603
    %v605 = vpop.f32.mrb[0].mxu0
    %606 = vmatprep.mubr.bf16.mxu0 0
    %607 = vmatmul.mubr.bf16.gmra.mrb[0].mxu0 %v446
    %v608 = vpop.f32.mrb[0].mxu0
    %v609 = vadd.f32 %v468, %v608
    %v610 = vpop.f32.mrb[0].mxu0
    %v611 = vpop.f32.mrb[0].mxu0
    %v612 = vadd.f32 %v468, %v611
    %v613 = vpop.f32.mrb[0].mxu0
    %614 = vdwg.mxu0
    %vm615 = vcmask 7168
    %616 = vst.msk [vmem:[%s7] sm:$0xff] %vm615, %v553
    %617 = vst.msk [vmem:[%s7 + $0x8] sm:$0xff] %vm615, %v556
    %618 = vst.msk [vmem:[%s7 + $0x10] sm:$0xff] %vm615, %v561
    %619 = vst.msk [vmem:[%s7 + $0x18] sm:$0xff] %vm615, %v564
    %620 = vst.msk [vmem:[%s7 + $0x20] sm:$0xff] %vm615, %v569
    %621 = vst.msk [vmem:[%s7 + $0x28] sm:$0xff] %vm615, %v572
    %622 = vst.msk [vmem:[%s7 + $0x30] sm:$0xff] %vm615, %v577
    %623 = vst.msk [vmem:[%s7 + $0x38] sm:$0xff] %vm615, %v580
    %624 = vst.msk [vmem:[%s7 + $0x40] sm:$0xff] %vm615, %v585
    %625 = vst.msk [vmem:[%s7 + $0x48] sm:$0xff] %vm615, %v588
    %626 = vst.msk [vmem:[%s7 + $0x50] sm:$0xff] %vm615, %v593
    %627 = vst.msk [vmem:[%s7 + $0x58] sm:$0xff] %vm615, %v596
    %628 = vst.msk [vmem:[%s7 + $0x60] sm:$0xff] %vm615, %v601
    %629 = vst.msk [vmem:[%s7 + $0x68] sm:$0xff] %vm615, %v604
    %630 = vst.msk [vmem:[%s7 + $0x70] sm:$0xff] %vm615, %v609
    %631 = vst.msk [vmem:[%s7 + $0x78] sm:$0xff] %vm615, %v612
    // Predicated region
    $region34: #{tpu_custom_call.1} parent=1 // pred_check
      _
    $region35: #{tpu_custom_call.1} parent=1 // pred_check_branch
      %633 = sbr.rel (0) target = $region37
    $region36: #{tpu_custom_call.1} parent=1 // pred_region
      _
    $region37: #{tpu_custom_call.1} parent=1 // pred_fallthru
      _
    // Predicated region
    $region38: #{tpu_custom_call.1} parent=1 // pred_check
      _
    $region39: #{tpu_custom_call.1} parent=1 // pred_check_branch
      %635 = sbr.rel (0) target = $region41
    $region40: #{tpu_custom_call.1} parent=1 // pred_region
      _
    $region41: #{tpu_custom_call.1} parent=1 // pred_fallthru
      _
    %636 = vsyncpa [#allocation3], 1

</llo_original>
